<compile_context>
chip_gen: v7x
topology: tpu7x:2x2x1
jax: 0.10.0
libtpu: 0.0.40
codegen_flags: <defaults>
</compile_context>

<pallas_src>
import functools

import jax
import jax.numpy as jnp
from jax.experimental import pallas as pl
from jax.experimental.pallas import tpu as pltpu

_LANE = 128
_SUBLANE = 8
_MIN_SPLIT_ROWS = 256  # only split the batch for megacore when each half >= this


def _round_up(x, m):
    return ((x + m - 1) // m) * m


def _pick_tile_b(batch, tile_b_max):
    """Batch-tile size: full batch for small inputs, split >=2 steps when the
    batch is large enough (v7x megacore), capped at tile_b_max."""
    if batch <= tile_b_max:
        if batch >= 2 * _MIN_SPLIT_ROWS:
            return _round_up((batch + 1) // 2, _SUBLANE)
        return batch  # single full-array block; no alignment constraint
    return _round_up(tile_b_max, _SUBLANE)


def _linear_kernel(x_ref, w_ref, b_ref, o_ref):
    # x_ref: (tile_b, K) activations (f32 or bf16)
    # w_ref: (K, n_pad) weight, MXU-native layout (n_pad = round_up(N, 128))
    # b_ref: (1, N) f32 bias
    # o_ref: (tile_b, N) f32 output, N = num_classes
    acc = jnp.dot(x_ref[...], w_ref[...], preferred_element_type=jnp.float32)
    n = o_ref.shape[-1]
    o_ref[...] = (acc[:, :n] + b_ref[...]).astype(o_ref.dtype)


def prepare_classifier_params(weight, bias):
    """One-time repack of PyTorch nn.Linear params for the Pallas kernel.

    weight: (num_classes, input_size)  ->  (input_size, n_pad) zero-padded,
            MXU-native (K on sublanes, N on lanes).  ~0.4 MB, done once.
    bias:   (num_classes,)             ->  (1, num_classes) float32.
    """
    num_classes = weight.shape[0]
    n_pad = _round_up(num_classes, _LANE)
    if n_pad != num_classes:
        weight = jnp.pad(weight, ((0, n_pad - num_classes), (0, 0)))
    w_kn = jnp.transpose(weight)                        # (K, n_pad)
    b_row = bias.reshape(1, num_classes).astype(jnp.float32)
    return w_kn, b_row


@functools.partial(jax.jit, static_argnames=("tile_b_max",))
def classifier_forward(x, w_kn, b_row, *, tile_b_max=1024):
    """Pallas equivalent of nn.Linear(input_size, num_classes).forward.

    Args:
      x:     (batch, input_size)  f32 or bf16
      w_kn:  (input_size, n_pad)  f32 or bf16   (from prepare_classifier_params)
      b_row: (1, num_classes)     f32           (from prepare_classifier_params)
      tile_b_max: max batch tile (1024 is VMEM-safe on v5e/v6e/v7x; v6e can use
                  2048 if vmem_limit_bytes is raised).
    Returns:
      (batch, num_classes) float32
    """
    batch, k = x.shape
    k_w, n_pad = w_kn.shape
    assert k == k_w, "x / weight inner-dim mismatch"
    b_row = b_row.reshape(1, -1).astype(jnp.float32)
    num_classes = b_row.shape[-1]

    tile_b = _pick_tile_b(batch, tile_b_max)
    grid = (pl.cdiv(batch, tile_b),)

    itemsize = lambda a: jnp.dtype(a.dtype).itemsize
    cost = pl.CostEstimate(
        flops=2 * batch * k * n_pad,
        transcendentals=0,
        bytes_accessed=(x.size * itemsize(x) + w_kn.size * itemsize(w_kn)
                        + num_classes * 4 + batch * num_classes * 4),
    )

    return pl.pallas_call(
        _linear_kernel,
        out_shape=jax.ShapeDtypeStruct((batch, num_classes), jnp.float32),
        grid_spec=pltpu.PrefetchScalarGridSpec(
            num_scalar_prefetch=0,
            grid=grid,
            in_specs=[
                pl.BlockSpec((tile_b, k), lambda i: (i, 0)),
                pl.BlockSpec((k, n_pad), lambda i: (0, 0)),
                pl.BlockSpec((1, num_classes), lambda i: (0, 0)),
            ],
            out_specs=pl.BlockSpec((tile_b, num_classes), lambda i: (i, 0)),
        ),
        compiler_params=pltpu.CompilerParams(
            dimension_semantics=("parallel",),
        ),
        cost_estimate=cost,
    )(x, w_kn, b_row)


def init_classifier_params(key, input_size, num_classes):
    # Mimics torch.nn.Linear default init: U(-1/sqrt(fan_in), 1/sqrt(fan_in)).
    kw, kb = jax.random.split(key)
    bound = 1.0 / jnp.sqrt(jnp.float32(input_size))
    weight = jax.random.uniform(
        kw, (num_classes, input_size), jnp.float32, -bound, bound)
    bias = jax.random.uniform(kb, (num_classes,), jnp.float32, -bound, bound)
    return weight, bias


if __name__ == "__main__":
    # pMNIST classifier shapes (input_size=784, num_classes=10), small batch.
    batch, input_size, num_classes = 8, 784, 10

    key = jax.random.PRNGKey(0)
    kx, kp = jax.random.split(key)
    x = jax.random.normal(kx, (batch, input_size), jnp.float32)
    weight, bias = init_classifier_params(kp, input_size, num_classes)

    # One-time param repack (MXU-native weight layout, padded to 128 lanes).
    w_kn, b_row = prepare_classifier_params(weight, bias)

    # --- f32 path, single-tile grid -------------------------------------------
    y = jax.block_until_ready(classifier_forward(x, w_kn, b_row))
    y_ref = x @ weight.T + bias
    assert y.shape == (batch, num_classes)
    assert jnp.allclose(y, y_ref, atol=1e-4, rtol=1e-4)

    # --- multi-tile grid with a ragged last block (no wrapper-side x padding) --
    batch2 = 20
    x2 = jax.random.normal(jax.random.PRNGKey(1), (batch2, input_size),
                           jnp.float32)
    y2 = jax.block_until_ready(
        classifier_forward(x2, w_kn, b_row, tile_b_max=8))
    y2_ref = x2 @ weight.T + bias
    assert y2.shape == (batch2, num_classes)
    assert jnp.allclose(y2, y2_ref, atol=1e-4, rtol=1e-4)

    # --- mid-size batch: exercises the >=2-step split (v7x megacore path) ------
    batch3 = 512
    x3 = jax.random.normal(jax.random.PRNGKey(2), (batch3, input_size),
                           jnp.float32)
    y3 = jax.block_until_ready(classifier_forward(x3, w_kn, b_row))
    y3_ref = x3 @ weight.T + bias
    assert y3.shape == (batch3, num_classes)
    assert jnp.allclose(y3, y3_ref, atol=1e-4, rtol=1e-4)

    # --- bf16 operand path (halves the dominant HBM stream; f32 accumulation) --
    y_bf16 = jax.block_until_ready(
        classifier_forward(x.astype(jnp.bfloat16),
                           w_kn.astype(jnp.bfloat16), b_row))
    assert y_bf16.shape == (batch, num_classes)
    assert jnp.allclose(y_bf16, y_ref, atol=5e-2, rtol=5e-2)

    print("KERNEL_OK")
</pallas_src>

<mosaic_0001>
module attributes {stable_mosaic.version = 11 : i64} {
  func.func @_linear_kernel(%arg0: i32, %arg1: memref<8x784xf32, #tpu.memory_space<vmem>>, %arg2: memref<784x128xf32, #tpu.memory_space<vmem>>, %arg3: memref<1x10xf32, #tpu.memory_space<vmem>>, %arg4: memref<8x10xf32, #tpu.memory_space<vmem>>) attributes {dimension_semantics = [#tpu.dimension_semantics<parallel>], iteration_bounds = array<i64: 1>, scalar_prefetch = 0 : i64, scratch_operands = 0 : i64, tpu.core_type = #tpu.core_type<tc>, window_params = [{transform_indices = @transform_0, window_bounds = array<i64: 8, 784>}, {pipeline_mode = #tpu.pipeline_mode<synchronous>, transform_indices = @transform_1, window_bounds = array<i64: 784, 128>}, {pipeline_mode = #tpu.pipeline_mode<synchronous>, transform_indices = @transform_2, window_bounds = array<i64: 1, 10>}, {transform_indices = @transform_3, window_bounds = array<i64: 8, 10>}]} {
    %c0 = arith.constant 0 : index
    %c0_0 = arith.constant 0 : index
    %0 = vector.load %arg1[%c0, %c0_0] : memref<8x784xf32, #tpu.memory_space<vmem>>, vector<8x784xf32>
    %c0_1 = arith.constant 0 : index
    %c0_2 = arith.constant 0 : index
    %1 = vector.load %arg2[%c0_1, %c0_2] : memref<784x128xf32, #tpu.memory_space<vmem>>, vector<784x128xf32>
    %cst = arith.constant dense<0.000000e+00> : vector<8x128xf32>
    %2 = tpu.matmul %0, %1, %cst {dimension_numbers = #tpu.dot_dimension_numbers<[1], [0], [0], [1], [0, 0, 1, 1], [], []>} : vector<8x784xf32>, vector<784x128xf32>, vector<8x128xf32> -> vector<8x128xf32>
    %3 = vector.extract_strided_slice %2 {offsets = [0, 0], sizes = [8, 10], strides = [1, 1]} : vector<8x128xf32> to vector<8x10xf32>
    %c0_3 = arith.constant 0 : index
    %c0_4 = arith.constant 0 : index
    %4 = vector.load %arg3[%c0_3, %c0_4] : memref<1x10xf32, #tpu.memory_space<vmem>>, vector<1x10xf32>
    %5 = vector.broadcast %4 : vector<1x10xf32> to vector<8x10xf32>
    %6 = arith.addf %3, %5 : vector<8x10xf32>
    %c0_5 = arith.constant 0 : index
    %c0_6 = arith.constant 0 : index
    %7 = vector.load %arg4[%c0_5, %c0_6] : memref<8x10xf32, #tpu.memory_space<vmem>>, vector<8x10xf32>
    tpu.vector_store %arg4[%c0_5, %c0_6], %6 {strides = array<i32>} : memref<8x10xf32, #tpu.memory_space<vmem>>, vector<8x10xf32>,
    return
  }
  func.func @transform_0(%arg0: i32) -> (i32, i32) {
    %c0_i32 = arith.constant 0 : i32
    %c0_i32_0 = arith.constant 0 : i32
    return %arg0, %c0_i32 : i32, i32
  }
  func.func @transform_1(%arg0: i32) -> (i32, i32) {
    %c0_i32 = arith.constant 0 : i32
    %c0_i32_0 = arith.constant 0 : i32
    %c0_i32_1 = arith.constant 0 : i32
    return %c0_i32, %c0_i32_0 : i32, i32
  }
  func.func @transform_2(%arg0: i32) -> (i32, i32) {
    %c0_i32 = arith.constant 0 : i32
    %c0_i32_0 = arith.constant 0 : i32
    %c0_i32_1 = arith.constant 0 : i32
    return %c0_i32, %c0_i32_0 : i32, i32
  }
  func.func @transform_3(%arg0: i32) -> (i32, i32) {
    %c0_i32 = arith.constant 0 : i32
    %c0_i32_0 = arith.constant 0 : i32
    return %arg0, %c0_i32 : i32, i32
  }
}

</mosaic_0001>

<llo_original>
// kernel: classifier_forward.1
$region0: #{classifier_forward.1}
  #allocation0 [shape = 'u32[]', space=smem, size = 0x4, offset = 0x4, fixed_abs, tag = 'smem constant byte address 0x4 - core index']
  #allocation1 [shape = 'u32[144,128]{1,0:T(1,128)}', space=vmem, size = 0x12000, scoped, tag = 'internal scratch']
  %s0 = inlined_call_operand.hbm [shape: f32[8,784], index: 0, kind: input, shape index: {}]
  %s1 = inlined_call_operand.hbm [shape: f32[784,128], index: 1, kind: input, shape index: {}]
  %s2 = inlined_call_operand.vmem [shape: f32[1,10], index: 2, kind: input, shape index: {}]
  %s3 = inlined_call_operand.hbm [shape: f32[8,10], index: 3, kind: output, shape index: {}]
  %s4 = sld [smem:[#allocation0]]
  $region30: #{classifier_forward.1} parent=0
    _
  %s6 = ssub.s32 1, %s4
  %s7 = scalar_select 0, %s6, %s4
  $region1: #{classifier_forward.1} parent=0
    #allocation2 [shape = 'u8[28672]{0}', space=vmem, size = 0x7000, scoped, tag = 'input window, operand 0, single buffered']
    #allocation3 [shape = 's32[1]{0}', space=sflag, size = 0x4, scoped, tag = 'scoped memory for classifier_forward.1']
    #allocation4 [shape = 's32[1]{0}', space=sflag, size = 0x4, scoped, tag = 'scoped memory for classifier_forward.1']
    #allocation5 [shape = 'u8[401408]{0}', space=vmem, size = 0x62000, scoped, tag = 'input window, operand 1, single buffered']
    #allocation6 [shape = 's32[1]{0}', space=sflag, size = 0x4, scoped, tag = 'scoped memory for classifier_forward.1']
    #allocation7 [shape = 'u8[4096]{0}', space=vmem, size = 0x1000, scoped, tag = 'output window, operand 0, single buffered']
    %8 = vsyncpa [#allocation3], 0
    %9 = vsyncpa [#allocation6], 0
    %10 = vsyncpa [#allocation4], 0
    // Predicated region
    $region2: #{classifier_forward.1} parent=1 // pred_check
      _
    $region3: #{classifier_forward.1} parent=1 // pred_check_branch
      %12 = sbr.rel (0) target = $region5
    $region4: #{classifier_forward.1} parent=1 // pred_region
      %s14 = ssub.s32 896, 896
      %15 = vsyncadd [#allocation3], %s14
      %s17 = sshll.u32 [#allocation2], 4
      %s18 = int_to_ptr.vmem [resolvable:$true] %s17
      %20 = dma.hbm_to_vmem [thread:$0]  %s0, 896, %s18, [#allocation3]
    $region5: #{classifier_forward.1} parent=1 // pred_fallthru
      _
    // Predicated region
    $region6: #{classifier_forward.1} parent=1 // pred_check
      _
    $region7: #{classifier_forward.1} parent=1 // pred_check_branch
      %22 = sbr.rel (0) target = $region9
    $region8: #{classifier_forward.1} parent=1 // pred_region
      %s24 = ssub.s32 12544, 12544
      %25 = vsyncadd [#allocation6], %s24
      %s26 = sshll.u32 [#allocation5], 4
      %s27 = int_to_ptr.vmem [resolvable:$true] %s26
      %32 = dma.hbm_to_vmem [thread:$0]  %s1, 12544, %s27, [#allocation6], 128, 128, 8
    $region9: #{classifier_forward.1} parent=1 // pred_fallthru
      _
    // Predicated region
    $region10: #{classifier_forward.1} parent=1 // pred_check
      _
    $region11: #{classifier_forward.1} parent=1 // pred_check_branch
      %34 = sbr.rel (0) target = $region13
    $region12: #{classifier_forward.1} parent=1 // pred_region
      _
    $region13: #{classifier_forward.1} parent=1 // pred_fallthru
      _
    // Predicated region
    $region14: #{classifier_forward.1} parent=1 // pred_check
      _
    $region15: #{classifier_forward.1} parent=1 // pred_check_branch
      %36 = sbr.rel (0) target = $region17
    $region16: #{classifier_forward.1} parent=1 // pred_region
      %37 = dma.done [#allocation3], 896
    $region17: #{classifier_forward.1} parent=1 // pred_fallthru
      _
    // Predicated region
    $region18: #{classifier_forward.1} parent=1 // pred_check
      _
    $region19: #{classifier_forward.1} parent=1 // pred_check_branch
      %39 = sbr.rel (0) target = $region21
    $region20: #{classifier_forward.1} parent=1 // pred_region
      %40 = dma.done [#allocation6], 12544
    $region21: #{classifier_forward.1} parent=1 // pred_fallthru
      _
    %v41 = vld [vmem:[#allocation2] sm:$0xff]
    %v42 = vld [vmem:[#allocation2 + $0x8] sm:$0xff]
    %v43 = vld [vmem:[#allocation2 + $0x10] sm:$0xff]
    %v44 = vld [vmem:[#allocation2 + $0x18] sm:$0xff]
    %v45 = vld [vmem:[#allocation2 + $0x20] sm:$0xff]
    %v46 = vld [vmem:[#allocation2 + $0x28] sm:$0xff]
    %v47 = vld [vmem:[#allocation2 + $0x30] sm:$0xff]
    %v48 = vld [vmem:[#allocation5] sm:$0xff]
    %v49 = vld [vmem:[#allocation5 + $0x8] sm:$0xff]
    %v50 = vld [vmem:[#allocation5 + $0x10] sm:$0xff]
    %v51 = vld [vmem:[#allocation5 + $0x18] sm:$0xff]
    %v52 = vld [vmem:[#allocation5 + $0x20] sm:$0xff]
    %v53 = vld [vmem:[#allocation5 + $0x28] sm:$0xff]
    %v54 = vld [vmem:[#allocation5 + $0x30] sm:$0xff]
    %v55 = vld [vmem:[#allocation5 + $0x38] sm:$0xff]
    %v56 = vld [vmem:[#allocation5 + $0x40] sm:$0xff]
    %v57 = vld [vmem:[#allocation5 + $0x48] sm:$0xff]
    %v58 = vld [vmem:[#allocation5 + $0x50] sm:$0xff]
    %v59 = vld [vmem:[#allocation5 + $0x58] sm:$0xff]
    %v60 = vld [vmem:[#allocation5 + $0x60] sm:$0xff]
    %v61 = vld [vmem:[#allocation5 + $0x68] sm:$0xff]
    %v62 = vld [vmem:[#allocation5 + $0x70] sm:$0xff]
    %v63 = vld [vmem:[#allocation5 + $0x78] sm:$0xff]
    %v64 = vld [vmem:[#allocation5 + $0x80] sm:$0xff]
    %v65 = vld [vmem:[#allocation5 + $0x88] sm:$0xff]
    %v66 = vld [vmem:[#allocation5 + $0x90] sm:$0xff]
    %v67 = vld [vmem:[#allocation5 + $0x98] sm:$0xff]
    %v68 = vld [vmem:[#allocation5 + $0xa0] sm:$0xff]
    %v69 = vld [vmem:[#allocation5 + $0xa8] sm:$0xff]
    %v70 = vld [vmem:[#allocation5 + $0xb0] sm:$0xff]
    %v71 = vld [vmem:[#allocation5 + $0xb8] sm:$0xff]
    %v72 = vld [vmem:[#allocation5 + $0xc0] sm:$0xff]
    %v73 = vld [vmem:[#allocation5 + $0xc8] sm:$0xff]
    %v74 = vld [vmem:[#allocation5 + $0xd0] sm:$0xff]
    %v75 = vld [vmem:[#allocation5 + $0xd8] sm:$0xff]
    %v76 = vld [vmem:[#allocation5 + $0xe0] sm:$0xff]
    %v77 = vld [vmem:[#allocation5 + $0xe8] sm:$0xff]
    %v78 = vld [vmem:[#allocation5 + $0xf0] sm:$0xff]
    %v79 = vld [vmem:[#allocation5 + $0xf8] sm:$0xff]
    %v80 = vld [vmem:[#allocation5 + $0x100] sm:$0xff]
    %v81 = vld [vmem:[#allocation5 + $0x108] sm:$0xff]
    %v82 = vld [vmem:[#allocation5 + $0x110] sm:$0xff]
    %v83 = vld [vmem:[#allocation5 + $0x118] sm:$0xff]
    %v84 = vld [vmem:[#allocation5 + $0x120] sm:$0xff]
    %v85 = vld [vmem:[#allocation5 + $0x128] sm:$0xff]
    %v86 = vld [vmem:[#allocation5 + $0x130] sm:$0xff]
    %v87 = vld [vmem:[#allocation5 + $0x138] sm:$0xff]
    %v88 = vld [vmem:[#allocation5 + $0x140] sm:$0xff]
    %v89 = vld [vmem:[#allocation5 + $0x148] sm:$0xff]
    %v90 = vld [vmem:[#allocation5 + $0x150] sm:$0xff]
    %v91 = vld [vmem:[#allocation5 + $0x158] sm:$0xff]
    %v92 = vld [vmem:[#allocation5 + $0x160] sm:$0xff]
    %v93 = vld [vmem:[#allocation5 + $0x168] sm:$0xff]
    %v94 = vld [vmem:[#allocation5 + $0x170] sm:$0xff]
    %v95 = vld [vmem:[#allocation5 + $0x178] sm:$0xff]
    %v96 = vld [vmem:[#allocation5 + $0x180] sm:$0xff]
    %v97 = vld [vmem:[#allocation5 + $0x188] sm:$0xff]
    %v98 = vld [vmem:[#allocation5 + $0x190] sm:$0xff]
    %v99 = vld [vmem:[#allocation5 + $0x198] sm:$0xff]
    %v100 = vld [vmem:[#allocation5 + $0x1a0] sm:$0xff]
    %v101 = vld [vmem:[#allocation5 + $0x1a8] sm:$0xff]
    %v102 = vld [vmem:[#allocation5 + $0x1b0] sm:$0xff]
    %v103 = vld [vmem:[#allocation5 + $0x1b8] sm:$0xff]
    %v104 = vld [vmem:[#allocation5 + $0x1c0] sm:$0xff]
    %v105 = vld [vmem:[#allocation5 + $0x1c8] sm:$0xff]
    %v106 = vld [vmem:[#allocation5 + $0x1d0] sm:$0xff]
    %v107 = vld [vmem:[#allocation5 + $0x1d8] sm:$0xff]
    %v108 = vld [vmem:[#allocation5 + $0x1e0] sm:$0xff]
    %v109 = vld [vmem:[#allocation5 + $0x1e8] sm:$0xff]
    %v110 = vld [vmem:[#allocation5 + $0x1f0] sm:$0xff]
    %v111 = vld [vmem:[#allocation5 + $0x1f8] sm:$0xff]
    %v112 = vld [vmem:[#allocation5 + $0x200] sm:$0xff]
    %v113 = vld [vmem:[#allocation5 + $0x208] sm:$0xff]
    %v114 = vld [vmem:[#allocation5 + $0x210] sm:$0xff]
    %v115 = vld [vmem:[#allocation5 + $0x218] sm:$0xff]
    %v116 = vld [vmem:[#allocation5 + $0x220] sm:$0xff]
    %v117 = vld [vmem:[#allocation5 + $0x228] sm:$0xff]
    %v118 = vld [vmem:[#allocation5 + $0x230] sm:$0xff]
    %v119 = vld [vmem:[#allocation5 + $0x238] sm:$0xff]
    %v120 = vld [vmem:[#allocation5 + $0x240] sm:$0xff]
    %v121 = vld [vmem:[#allocation5 + $0x248] sm:$0xff]
    %v122 = vld [vmem:[#allocation5 + $0x250] sm:$0xff]
    %v123 = vld [vmem:[#allocation5 + $0x258] sm:$0xff]
    %v124 = vld [vmem:[#allocation5 + $0x260] sm:$0xff]
    %v125 = vld [vmem:[#allocation5 + $0x268] sm:$0xff]
    %v126 = vld [vmem:[#allocation5 + $0x270] sm:$0xff]
    %v127 = vld [vmem:[#allocation5 + $0x278] sm:$0xff]
    %v128 = vld [vmem:[#allocation5 + $0x280] sm:$0xff]
    %v129 = vld [vmem:[#allocation5 + $0x288] sm:$0xff]
    %v130 = vld [vmem:[#allocation5 + $0x290] sm:$0xff]
    %v131 = vld [vmem:[#allocation5 + $0x298] sm:$0xff]
    %v132 = vld [vmem:[#allocation5 + $0x2a0] sm:$0xff]
    %v133 = vld [vmem:[#allocation5 + $0x2a8] sm:$0xff]
    %v134 = vld [vmem:[#allocation5 + $0x2b0] sm:$0xff]
    %v135 = vld [vmem:[#allocation5 + $0x2b8] sm:$0xff]
    %v136 = vld [vmem:[#allocation5 + $0x2c0] sm:$0xff]
    %v137 = vld [vmem:[#allocation5 + $0x2c8] sm:$0xff]
    %v138 = vld [vmem:[#allocation5 + $0x2d0] sm:$0xff]
    %v139 = vld [vmem:[#allocation5 + $0x2d8] sm:$0xff]
    %v140 = vld [vmem:[#allocation5 + $0x2e0] sm:$0xff]
    %v141 = vld [vmem:[#allocation5 + $0x2e8] sm:$0xff]
    %v142 = vld [vmem:[#allocation5 + $0x2f0] sm:$0xff]
    %v143 = vld [vmem:[#allocation5 + $0x2f8] sm:$0xff]
    %v144 = vld [vmem:[#allocation5 + $0x300] sm:$0xff]
    %v145 = vld [vmem:[#allocation5 + $0x308] sm:$0xff]
    %vm146 = vcmask 130048
    %v148 = vsel %vm146, %v47, 0
    %150 = vmatprep.subr.mxu0 0.0
    %151 = vmatpush1.msra.mxu0 %v48
    %152 = vmatprep.subr.mxu0 0.0
    %153 = vmatpush1.msra.mxu0 %v49
    %154 = vmatprep.subr.mxu0 0.0
    %155 = vmatpush1.msra.mxu0 %v50
    %156 = vmatprep.subr.mxu0 0.0
    %157 = vmatpush1.msra.mxu0 %v51
    %158 = vmatprep.subr.mxu0 0.0
    %159 = vmatpush1.msra.mxu0 %v52
    %160 = vmatprep.subr.mxu0 0.0
    %161 = vmatpush1.msra.mxu0 %v53
    %162 = vmatprep.subr.mxu0 0.0
    %163 = vmatpush1.msra.mxu0 %v54
    %164 = vmatprep.subr.mxu0 0.0
    %165 = vmatpush1.msra.mxu0 %v55
    %166 = vmatprep.subr.mxu0 0.0
    %167 = vmatpush1.msra.mxu0 %v56
    %168 = vmatprep.subr.mxu0 0.0
    %169 = vmatpush1.msra.mxu0 %v57
    %170 = vmatprep.subr.mxu0 0.0
    %171 = vmatpush1.msra.mxu0 %v58
    %172 = vmatprep.subr.mxu0 0.0
    %173 = vmatpush1.msra.mxu0 %v59
    %174 = vmatprep.subr.mxu0 0.0
    %175 = vmatpush1.msra.mxu0 %v60
    %176 = vmatprep.subr.mxu0 0.0
    %177 = vmatpush1.msra.mxu0 %v61
    %178 = vmatprep.subr.mxu0 0.0
    %179 = vmatpush1.msra.mxu0 %v62
    %180 = vmatprep.subr.mxu0 0.0
    %181 = vmatpush1.msra.mxu0 %v63
    %182 = vmatprep.subr.mxu0 0.0
    %183 = vmatpush1.msra.mxu0 %v64
    %184 = vmatprep.subr.mxu0 0.0
    %185 = vmatpush1.msra.mxu0 %v65
    %186 = vmatprep.subr.mxu0 0.0
    %187 = vmatpush1.msra.mxu0 %v66
    %188 = vmatprep.subr.mxu0 0.0
    %189 = vmatpush1.msra.mxu0 %v67
    %190 = vmatprep.subr.mxu0 0.0
    %191 = vmatpush1.msra.mxu0 %v68
    %192 = vmatprep.subr.mxu0 0.0
    %193 = vmatpush1.msra.mxu0 %v69
    %194 = vmatprep.subr.mxu0 0.0
    %195 = vmatpush1.msra.mxu0 %v70
    %196 = vmatprep.subr.mxu0 0.0
    %197 = vmatpush1.msra.mxu0 %v71
    %198 = vmatprep.subr.mxu0 0.0
    %199 = vmatpush1.msra.mxu0 %v72
    %200 = vmatprep.subr.mxu0 0.0
    %201 = vmatpush1.msra.mxu0 %v73
    %202 = vmatprep.subr.mxu0 0.0
    %203 = vmatpush1.msra.mxu0 %v74
    %204 = vmatprep.subr.mxu0 0.0
    %205 = vmatpush1.msra.mxu0 %v75
    %206 = vmatprep.subr.mxu0 0.0
    %207 = vmatpush1.msra.mxu0 %v76
    %208 = vmatprep.subr.mxu0 0.0
    %209 = vmatpush1.msra.mxu0 %v77
    %210 = vmatprep.subr.mxu0 0.0
    %211 = vmatpush1.msra.mxu0 %v78
    %212 = vmatprep.subr.mxu0 0.0
    %213 = vmatpush1.msra.mxu0 %v79
    %214 = vmatprep.mubr.f32.mxu0 %v42
    %215 = vmatmul.mubr.f32.gmra.mrb[0].mxu0 %v41
    %v216 = vpop.f32.mrb[0].mxu0
    %v217 = vadd.f32 0.0, %v216
    %v218 = vpop.f32.mrb[0].mxu0
    %219 = vdwg.mxu0
    %220 = vmatprep.subr.mxu0 0.0
    %221 = vmatpush1.msra.mxu0 %v80
    %222 = vmatprep.subr.mxu0 0.0
    %223 = vmatpush1.msra.mxu0 %v81
    %224 = vmatprep.subr.mxu0 0.0
    %225 = vmatpush1.msra.mxu0 %v82
    %226 = vmatprep.subr.mxu0 0.0
    %227 = vmatpush1.msra.mxu0 %v83
    %228 = vmatprep.subr.mxu0 0.0
    %229 = vmatpush1.msra.mxu0 %v84
    %230 = vmatprep.subr.mxu0 0.0
    %231 = vmatpush1.msra.mxu0 %v85
    %232 = vmatprep.subr.mxu0 0.0
    %233 = vmatpush1.msra.mxu0 %v86
    %234 = vmatprep.subr.mxu0 0.0
    %235 = vmatpush1.msra.mxu0 %v87
    %236 = vmatprep.subr.mxu0 0.0
    %237 = vmatpush1.msra.mxu0 %v88
    %238 = vmatprep.subr.mxu0 0.0
    %239 = vmatpush1.msra.mxu0 %v89
    %240 = vmatprep.subr.mxu0 0.0
    %241 = vmatpush1.msra.mxu0 %v90
    %242 = vmatprep.subr.mxu0 0.0
    %243 = vmatpush1.msra.mxu0 %v91
    %244 = vmatprep.subr.mxu0 0.0
    %245 = vmatpush1.msra.mxu0 %v92
    %246 = vmatprep.subr.mxu0 0.0
    %247 = vmatpush1.msra.mxu0 %v93
    %248 = vmatprep.subr.mxu0 0.0
    %249 = vmatpush1.msra.mxu0 %v94
    %250 = vmatprep.subr.mxu0 0.0
    %251 = vmatpush1.msra.mxu0 %v95
    %252 = vmatprep.subr.mxu0 0.0
    %253 = vmatpush1.msra.mxu0 %v96
    %254 = vmatprep.subr.mxu0 0.0
    %255 = vmatpush1.msra.mxu0 %v97
    %256 = vmatprep.subr.mxu0 0.0
    %257 = vmatpush1.msra.mxu0 %v98
    %258 = vmatprep.subr.mxu0 0.0
    %259 = vmatpush1.msra.mxu0 %v99
    %260 = vmatprep.subr.mxu0 0.0
    %261 = vmatpush1.msra.mxu0 %v100
    %262 = vmatprep.subr.mxu0 0.0
    %263 = vmatpush1.msra.mxu0 %v101
    %264 = vmatprep.subr.mxu0 0.0
    %265 = vmatpush1.msra.mxu0 %v102
    %266 = vmatprep.subr.mxu0 0.0
    %267 = vmatpush1.msra.mxu0 %v103
    %268 = vmatprep.subr.mxu0 0.0
    %269 = vmatpush1.msra.mxu0 %v104
    %270 = vmatprep.subr.mxu0 0.0
    %271 = vmatpush1.msra.mxu0 %v105
    %272 = vmatprep.subr.mxu0 0.0
    %273 = vmatpush1.msra.mxu0 %v106
    %274 = vmatprep.subr.mxu0 0.0
    %275 = vmatpush1.msra.mxu0 %v107
    %276 = vmatprep.subr.mxu0 0.0
    %277 = vmatpush1.msra.mxu0 %v108
    %278 = vmatprep.subr.mxu0 0.0
    %279 = vmatpush1.msra.mxu0 %v109
    %280 = vmatprep.subr.mxu0 0.0
    %281 = vmatpush1.msra.mxu0 %v110
    %282 = vmatprep.subr.mxu0 0.0
    %283 = vmatpush1.msra.mxu0 %v111
    %284 = vmatprep.mubr.f32.mxu0 %v44
    %285 = vmatmul.mubr.f32.gmra.mrb[0].mxu0 %v43
    %v286 = vpop.f32.mrb[0].mxu0
    %v287 = vadd.f32 %v217, %v286
    %v288 = vpop.f32.mrb[0].mxu0
    %289 = vdwg.mxu0
    %290 = vmatprep.subr.mxu0 0.0
    %291 = vmatpush1.msra.mxu0 %v112
    %292 = vmatprep.subr.mxu0 0.0
    %293 = vmatpush1.msra.mxu0 %v113
    %294 = vmatprep.subr.mxu0 0.0
    %295 = vmatpush1.msra.mxu0 %v114
    %296 = vmatprep.subr.mxu0 0.0
    %297 = vmatpush1.msra.mxu0 %v115
    %298 = vmatprep.subr.mxu0 0.0
    %299 = vmatpush1.msra.mxu0 %v116
    %300 = vmatprep.subr.mxu0 0.0
    %301 = vmatpush1.msra.mxu0 %v117
    %302 = vmatprep.subr.mxu0 0.0
    %303 = vmatpush1.msra.mxu0 %v118
    %304 = vmatprep.subr.mxu0 0.0
    %305 = vmatpush1.msra.mxu0 %v119
    %306 = vmatprep.subr.mxu0 0.0
    %307 = vmatpush1.msra.mxu0 %v120
    %308 = vmatprep.subr.mxu0 0.0
    %309 = vmatpush1.msra.mxu0 %v121
    %310 = vmatprep.subr.mxu0 0.0
    %311 = vmatpush1.msra.mxu0 %v122
    %312 = vmatprep.subr.mxu0 0.0
    %313 = vmatpush1.msra.mxu0 %v123
    %314 = vmatprep.subr.mxu0 0.0
    %315 = vmatpush1.msra.mxu0 %v124
    %316 = vmatprep.subr.mxu0 0.0
    %317 = vmatpush1.msra.mxu0 %v125
    %318 = vmatprep.subr.mxu0 0.0
    %319 = vmatpush1.msra.mxu0 %v126
    %320 = vmatprep.subr.mxu0 0.0
    %321 = vmatpush1.msra.mxu0 %v127
    %322 = vmatprep.subr.mxu0 0.0
    %323 = vmatpush1.msra.mxu0 %v128
    %324 = vmatprep.subr.mxu0 0.0
    %325 = vmatpush1.msra.mxu0 %v129
    %326 = vmatprep.subr.mxu0 0.0
    %327 = vmatpush1.msra.mxu0 %v130
    %328 = vmatprep.subr.mxu0 0.0
    %329 = vmatpush1.msra.mxu0 %v131
    %330 = vmatprep.subr.mxu0 0.0
    %331 = vmatpush1.msra.mxu0 %v132
    %332 = vmatprep.subr.mxu0 0.0
    %333 = vmatpush1.msra.mxu0 %v133
    %334 = vmatprep.subr.mxu0 0.0
    %335 = vmatpush1.msra.mxu0 %v134
    %336 = vmatprep.subr.mxu0 0.0
    %337 = vmatpush1.msra.mxu0 %v135
    %338 = vmatprep.subr.mxu0 0.0
    %339 = vmatpush1.msra.mxu0 %v136
    %340 = vmatprep.subr.mxu0 0.0
    %341 = vmatpush1.msra.mxu0 %v137
    %342 = vmatprep.subr.mxu0 0.0
    %343 = vmatpush1.msra.mxu0 %v138
    %344 = vmatprep.subr.mxu0 0.0
    %345 = vmatpush1.msra.mxu0 %v139
    %346 = vmatprep.subr.mxu0 0.0
    %347 = vmatpush1.msra.mxu0 %v140
    %348 = vmatprep.subr.mxu0 0.0
    %349 = vmatpush1.msra.mxu0 %v141
    %350 = vmatprep.subr.mxu0 0.0
    %351 = vmatpush1.msra.mxu0 %v142
    %352 = vmatprep.subr.mxu0 0.0
    %353 = vmatpush1.msra.mxu0 %v143
    %354 = vmatprep.mubr.f32.mxu0 %v46
    %355 = vmatmul.mubr.f32.gmra.mrb[0].mxu0 %v45
    %v356 = vpop.f32.mrb[0].mxu0
    %v357 = vadd.f32 %v287, %v356
    %v358 = vpop.f32.mrb[0].mxu0
    %359 = vdwg.mxu0
    %360 = vmatprep.subr.mxu0 0.0
    %361 = vmatpush1.msra.mxu0 %v144
    %362 = vmatprep.subr.mxu0 0.0
    %363 = vmatpush1.msra.mxu0 %v145
    %364 = vmatprep.subr.mxu0 0.0
    %365 = vmatpush1.msra.mxu0 0.0
    %366 = vmatprep.subr.mxu0 0.0
    %367 = vmatpush1.msra.mxu0 0.0
    %368 = vmatprep.subr.mxu0 0.0
    %369 = vmatpush1.msra.mxu0 0.0
    %370 = vmatprep.subr.mxu0 0.0
    %371 = vmatpush1.msra.mxu0 0.0
    %372 = vmatprep.subr.mxu0 0.0
    %373 = vmatpush1.msra.mxu0 0.0
    %374 = vmatprep.subr.mxu0 0.0
    %375 = vmatpush1.msra.mxu0 0.0
    %376 = vmatprep.subr.mxu0 0.0
    %377 = vmatpush1.msra.mxu0 0.0
    %378 = vmatprep.subr.mxu0 0.0
    %379 = vmatpush1.msra.mxu0 0.0
    %380 = vmatprep.subr.mxu0 0.0
    %381 = vmatpush1.msra.mxu0 0.0
    %382 = vmatprep.subr.mxu0 0.0
    %383 = vmatpush1.msra.mxu0 0.0
    %384 = vmatprep.subr.mxu0 0.0
    %385 = vmatpush1.msra.mxu0 0.0
    %386 = vmatprep.subr.mxu0 0.0
    %387 = vmatpush1.msra.mxu0 0.0
    %388 = vmatprep.subr.mxu0 0.0
    %389 = vmatpush1.msra.mxu0 0.0
    %390 = vmatprep.subr.mxu0 0.0
    %391 = vmatpush1.msra.mxu0 0.0
    %392 = vmatprep.subr.mxu0 0.0
    %393 = vmatpush1.msra.mxu0 0.0
    %394 = vmatprep.subr.mxu0 0.0
    %395 = vmatpush1.msra.mxu0 0.0
    %396 = vmatprep.subr.mxu0 0.0
    %397 = vmatpush1.msra.mxu0 0.0
    %398 = vmatprep.subr.mxu0 0.0
    %399 = vmatpush1.msra.mxu0 0.0
    %400 = vmatprep.subr.mxu0 0.0
    %401 = vmatpush1.msra.mxu0 0.0
    %402 = vmatprep.subr.mxu0 0.0
    %403 = vmatpush1.msra.mxu0 0.0
    %404 = vmatprep.subr.mxu0 0.0
    %405 = vmatpush1.msra.mxu0 0.0
    %406 = vmatprep.subr.mxu0 0.0
    %407 = vmatpush1.msra.mxu0 0.0
    %408 = vmatprep.subr.mxu0 0.0
    %409 = vmatpush1.msra.mxu0 0.0
    %410 = vmatprep.subr.mxu0 0.0
    %411 = vmatpush1.msra.mxu0 0.0
    %412 = vmatprep.subr.mxu0 0.0
    %413 = vmatpush1.msra.mxu0 0.0
    %414 = vmatprep.subr.mxu0 0.0
    %415 = vmatpush1.msra.mxu0 0.0
    %416 = vmatprep.subr.mxu0 0.0
    %417 = vmatpush1.msra.mxu0 0.0
    %418 = vmatprep.subr.mxu0 0.0
    %419 = vmatpush1.msra.mxu0 0.0
    %420 = vmatprep.subr.mxu0 0.0
    %421 = vmatpush1.msra.mxu0 0.0
    %422 = vmatprep.subr.mxu0 0.0
    %423 = vmatpush1.msra.mxu0 0.0
    %424 = vmatprep.mubr.f32.mxu0 0.0
    %425 = vmatmul.mubr.f32.gmra.mrb[0].mxu0 %v148
    %v426 = vpop.f32.mrb[0].mxu0
    %v427 = vadd.f32 %v357, %v426
    %v428 = vpop.f32.mrb[0].mxu0
    %429 = vdwg.mxu0
    %v430 = vld [vmem:[%s2] sm:$0x1]
    %v432 = vlaneseq
    %v433 = vshrl.u32 %v432, 7
    %v434 = vsub.s32 0, %v433
    %v435 = vrot.slane %v430, %v434
    %v437 = vadd.f32 %v427, %v435
    %vm438 = vcmask 80896
    %439 = vst.msk [vmem:[#allocation7] sm:$0xff] %vm438, %v437
    // Predicated region
    $region22: #{classifier_forward.1} parent=1 // pred_check
      _
    $region23: #{classifier_forward.1} parent=1 // pred_check_branch
      %441 = sbr.rel (0) target = $region25
    $region24: #{classifier_forward.1} parent=1 // pred_region
      %s443 = ssub.s32 128, 128
      %444 = vsyncadd [#allocation4], %s443
      %s446 = sshll.u32 [#allocation7], 4
      %s447 = int_to_ptr.vmem [resolvable:$true] %s446
      %449 = dma.vmem_to_hbm [thread:$0]  %s447, 128, %s3, [#allocation4]
    $region25: #{classifier_forward.1} parent=1 // pred_fallthru
      _
    // Predicated region
    $region26: #{classifier_forward.1} parent=1 // pred_check
      _
    $region27: #{classifier_forward.1} parent=1 // pred_check_branch
      %451 = sbr.rel (0) target = $region29
    $region28: #{classifier_forward.1} parent=1 // pred_region
      %452 = dma.done [#allocation4], 128
    $region29: #{classifier_forward.1} parent=1 // pred_fallthru
      _
    %453 = vsyncpa [#allocation3], 1
    %454 = vsyncpa [#allocation6], 1
    %455 = vsyncpa [#allocation4], 1

</llo_original>
